<compile_context>
chip_gen: v7x
topology: tpu7x:2x2x1
jax: 0.10.0
libtpu: 0.0.40
codegen_flags: <defaults>
</compile_context>

<pallas_src>
import functools

import jax
import jax.numpy as jnp
import numpy as np
from jax.experimental import pallas as pl
from jax.experimental.pallas import tpu as pltpu


def _gelu(h, approximate):
    if approximate:
        # tanh form -> EUP (bundle slot otherwise idle here)
        c = 0.7978845608028654  # sqrt(2/pi)
        return 0.5 * h * (1.0 + jnp.tanh(c * (h + 0.044715 * h * h * h)))
    # PyTorch nn.GELU() default = exact erf formulation.
    return 0.5 * h * (1.0 + jax.lax.erf(h * 0.7071067811865476))


def ams_kernel(xt_ref, wcat_ref, bcat_ref, exp_ref, wo1_ref, wo2_ref, out_ref,
               *, num_experts, hidden_dim, top_k, alpha, gelu_approximate):
    """One grid step = TM rows (rows = flattened (batch, feature)).

    xt_ref  : (TM, 2L)        [x | time_embedding] rows
    wcat_ref: (2L, E*H + E)   block-diag [expert layer-1 | gating] weights
    bcat_ref: (1,  E*H + E)   [b1 | bg]
    exp_ref : (E, E*H)        gate -> per-H-column expansion (0/1), f32
    wo1_ref : (E*H, SLAB)     layer-2 weights scattered into output lanes [0:P)
    wo2_ref : (E,   SLAB)     layer-2 bias into lanes [0:P), identity into [P:P+E)
    out_ref : (TM, SLAB)      lane-dense output slab: [y | gates | 0...]
    """
    E, H = num_experts, hidden_dim
    EH = E * H
    cd = xt_ref.dtype

    # ---- fused gating + expert layer-1 matmul: columns [h_pre | logits] ----
    z = jnp.dot(xt_ref[...], wcat_ref[...], preferred_element_type=jnp.float32)
    z = z + bcat_ref[...]
    h_pre = z[:, :EH]                       # (TM, E*H)  lane-tile aligned slice
    logits = z[:, EH:EH + E]                # (TM, E)    f32

    # ---- TopKGating (eval path, clean logits) ----
    # top_k-th largest value per row via iterative max (ties are measure-zero
    # for float logits; matches torch.kthvalue threshold semantics otherwise).
    cur = logits
    for _ in range(top_k - 1):
        m = jnp.max(cur, axis=1, keepdims=True)
        cur = jnp.where(cur == m, -jnp.inf, cur)
    thresh = jnp.max(cur, axis=1, keepdims=True)
    below = logits < thresh

    mmax = jnp.max(logits, axis=1, keepdims=True)
    ex = jnp.exp(logits - mmax)
    sm = ex / jnp.sum(ex, axis=1, keepdims=True)
    dec = jnp.where(below, alpha * jnp.log(sm + 1.0), alpha * (jnp.exp(sm) - 1.0))
    dmax = jnp.max(dec, axis=1, keepdims=True)
    ed = jnp.exp(dec - dmax)
    gates = ed / jnp.sum(ed, axis=1, keepdims=True)        # (TM, E) f32

    # ---- experts + gated combine (Dropout = identity in eval mode) ----
    h = _gelu(h_pre, gelu_approximate)                                            # (TM, E*H) f32
    g_exp = jnp.dot(gates, exp_ref[...], preferred_element_type=jnp.float32)      # (TM, E*H)
    hg = (h * g_exp).astype(cd)

    # lane-dense output slab, single full-width store:
    #   cols [0:P)   = sum_e g_e * (GELU(x W1_e + b1_e) W2_e + b2_e)
    #   cols [P:P+E) = gates          (bias + gate passthrough share one tiny matmul)
    slab = jnp.dot(hg, wo1_ref[...], preferred_element_type=jnp.float32)
    slab = slab + jnp.dot(gates, wo2_ref[...], preferred_element_type=jnp.float32)
    out_ref[...] = slab.astype(out_ref.dtype)


def _round_up(a, b):
    return (a + b - 1) // b * b


def ams_forward(x, time_embedding, params, *, pred_len, num_experts=4, top_k=2,
                alpha=10.0, loss_coef=1.0, compute_dtype=jnp.bfloat16,
                gelu_approximate=True, tm_cap=2048):
    """x, time_embedding: (B, F, L) float32.  Returns ((B, F, pred_len), loss)."""
    wg, bg, w1, b1, w2, b2 = params
    B, F, L = x.shape
    E = num_experts
    H = w1.shape[-1]
    P = pred_len
    EH = E * H
    SLAB = _round_up(max(P + E, 128), 128)     # lane-dense output width
    f32 = jnp.float32

    # ---- pack weights into fused / stacked layouts (tiny, one-time) ----
    w1c = jnp.transpose(w1, (1, 0, 2)).reshape(L, EH)            # (L, E*H)
    b1c = b1.reshape(1, EH)
    wcat = (jnp.zeros((2 * L, EH + E), f32)
            .at[:L, :EH].set(w1c)                                # x -> expert layer-1
            .at[L:, EH:].set(wg))                                # t -> gating logits
    bcat = jnp.concatenate([b1c, bg.reshape(1, E)], axis=1)      # (1, E*H + E)

    w2s = w2.reshape(EH, P)                                      # experts stacked on rows
    b2m = b2.reshape(E, P)
    wo1 = jnp.zeros((EH, SLAB), f32).at[:, :P].set(w2s)          # layer-2 into lanes [0:P)
    wo2 = (jnp.zeros((E, SLAB), f32)
           .at[:, :P].set(b2m)                                   # gated bias into [0:P)
           .at[:, P:P + E].set(jnp.eye(E, dtype=f32)))           # gates passthrough [P:P+E)
    expand = jnp.asarray(np.kron(np.eye(E), np.ones((1, H))), f32)  # (E, E*H)

    # ---- flatten (B, F) into the matmul M dimension; concat x|t on lanes ----
    M = B * F
    xt = jnp.concatenate([x.reshape(M, L), time_embedding.reshape(M, L)], axis=1)

    # Tile as large as possible (amortize ~0.35us/grid-step), but keep >=2 grid
    # steps when M allows so the "parallel" axis shards across both v7x TCs.
    n_tiles = max(2, -(-M // tm_cap))
    TM = max(8, _round_up(-(-M // n_tiles), 8))
    M_pad = _round_up(M, TM)
    if M_pad != M:
        xt = jnp.pad(xt, ((0, M_pad - M), (0, 0)))

    xt = xt.astype(compute_dtype)
    wcat_c = wcat.astype(compute_dtype)        # MXU operands (bf16 in fast mode)
    wo1_c = wo1.astype(compute_dtype)
    # exp / wo2 stay f32: tiny K=4 matmuls, keeps gates passthrough exact.

    kernel = functools.partial(
        ams_kernel, num_experts=E, hidden_dim=H, top_k=top_k, alpha=alpha,
        gelu_approximate=gelu_approximate)

    slab = pl.pallas_call(
        kernel,
        out_shape=jax.ShapeDtypeStruct((M_pad, SLAB), jnp.float32),
        grid=(M_pad // TM,),
        in_specs=[
            pl.BlockSpec((TM, 2 * L), lambda i: (i, 0)),          # [x | t] rows
            pl.BlockSpec((2 * L, EH + E), lambda i: (0, 0)),      # fused layer-1 + gating W
            pl.BlockSpec((1, EH + E), lambda i: (0, 0)),          # fused bias
            pl.BlockSpec((E, EH), lambda i: (0, 0)),              # gate -> block expansion
            pl.BlockSpec((EH, SLAB), lambda i: (0, 0)),           # layer-2 W (lane-dense)
            pl.BlockSpec((E, SLAB), lambda i: (0, 0)),            # layer-2 bias + gate id
        ],
        out_specs=pl.BlockSpec((TM, SLAB), lambda i: (i, 0)),
        compiler_params=pltpu.CompilerParams(dimension_semantics=("parallel",)),
    )(xt, wcat_c, bcat, expand, wo1_c, wo2)

    out = slab[:M, :P].reshape(B, F, P)
    gates = slab[:M, P:P + E].reshape(B, F, E)

    # ---- load-balance loss (cv_squared of importance), reduced in the wrapper ----
    imp = jnp.sum(gates, axis=0)                               # (F, E)
    mean = jnp.mean(imp, axis=1, keepdims=True)                # (F, 1)
    var = P * jnp.sum((imp - mean) ** 2, axis=1) / (E * P - 1)
    cv = var / (mean[:, 0] ** 2 + 1e-10)
    loss = loss_coef * jnp.sum(cv)
    return out, loss


def ams_reference(x, t, params, *, pred_len, num_experts=4, top_k=2,
                  alpha=10.0, loss_coef=1.0):
    """Pure-JAX reference mirroring the PyTorch forward (eval mode, exact GELU)."""
    wg, bg, w1, b1, w2, b2 = params
    B, F, L = x.shape
    outs = []
    loss = jnp.float32(0.0)
    for i in range(F):
        xi = x[:, i, :]
        ti = t[:, i, :]
        logits = ti @ wg + bg[0]
        k = num_experts - top_k + 1
        kth = jnp.sort(logits, axis=1)[:, k - 1:k]
        mask = logits < kth
        sm = jax.nn.softmax(logits, axis=1)
        dec = jnp.where(mask, alpha * jnp.log(sm + 1.0), alpha * (jnp.exp(sm) - 1.0))
        gates = jax.nn.softmax(dec, axis=1)
        ys = []
        for e in range(num_experts):
            h = xi @ w1[e] + b1[e]
            h = _gelu(h, approximate=False)
            ys.append(h @ w2[e] + b2[e])
        ys = jnp.stack(ys, axis=1)                                   # (B,E,P)
        g = jnp.broadcast_to(gates[:, :, None], (B, num_experts, pred_len))
        outs.append(jnp.sum(g * ys, axis=1))                         # (B,P)
        imp = jnp.sum(g, axis=0)                                     # (E,P)
        mean = jnp.mean(imp)
        var = jnp.sum((imp - mean) ** 2) / (imp.size - 1)
        loss = loss + loss_coef * var / (mean ** 2 + 1e-10)
    return jnp.stack(outs, axis=1), loss


def init_params(key, L, H, P, E):
    ks = jax.random.split(key, 6)
    wg = 0.1 * jax.random.normal(ks[0], (L, E), jnp.float32)
    bg = 0.1 * jax.random.normal(ks[1], (1, E), jnp.float32)
    w1 = 0.1 * jax.random.normal(ks[2], (E, L, H), jnp.float32)
    b1 = 0.1 * jax.random.normal(ks[3], (E, 1, H), jnp.float32)
    w2 = 0.1 * jax.random.normal(ks[4], (E, H, P), jnp.float32)
    b2 = 0.1 * jax.random.normal(ks[5], (E, 1, P), jnp.float32)
    return wg, bg, w1, b1, w2, b2


if __name__ == "__main__":
    # Shapes consistent with the module:
    #   input_shape[0] = L = 16, pred_len = 8, ff_dim = 32, num_experts = 4, top_k = 2
    B, F, L, P, H, E, TOPK = 2, 4, 16, 8, 32, 4, 2

    key = jax.random.PRNGKey(0)
    kx, kt, kp = jax.random.split(key, 3)
    x = jax.random.normal(kx, (B, F, L), jnp.float32)
    time_embedding = jax.random.normal(kt, (B, F, L), jnp.float32)
    params = init_params(kp, L, H, P, E)

    out_ref, loss_ref = ams_reference(x, time_embedding, params, pred_len=P,
                                      num_experts=E, top_k=TOPK)

    # Strict check: f32 MXU operands + exact erf GELU (matches PyTorch eval forward).
    out32, loss32 = ams_forward(x, time_embedding, params, pred_len=P,
                                num_experts=E, top_k=TOPK,
                                compute_dtype=jnp.float32, gelu_approximate=False)
    jax.block_until_ready((out32, loss32))
    np.testing.assert_allclose(np.asarray(out32), np.asarray(out_ref),
                               rtol=1e-3, atol=1e-3)
    np.testing.assert_allclose(np.asarray(loss32), np.asarray(loss_ref),
                               rtol=1e-3, atol=1e-3)

    # Fast path (per perf review): bf16 MXU operands + tanh GELU; looser tolerance
    # against the f32/erf reference (accumulation stays f32).
    outbf, lossbf = ams_forward(x, time_embedding, params, pred_len=P,
                                num_experts=E, top_k=TOPK,
                                compute_dtype=jnp.bfloat16, gelu_approximate=True)
    jax.block_until_ready((outbf, lossbf))
    np.testing.assert_allclose(np.asarray(outbf), np.asarray(out_ref),
                               rtol=5e-2, atol=5e-2)
    np.testing.assert_allclose(np.asarray(lossbf), np.asarray(loss_ref),
                               rtol=2e-1, atol=2e-1)

    print("KERNEL_OK")
</pallas_src>

<mosaic_0001>
module attributes {stable_mosaic.version = 11 : i64} {
  func.func @ams_kernel(%arg0: i32, %arg1: memref<8x32xf32, #tpu.memory_space<vmem>>, %arg2: memref<32x132xf32, #tpu.memory_space<vmem>>, %arg3: memref<1x132xf32, #tpu.memory_space<vmem>>, %arg4: memref<4x128xf32, #tpu.memory_space<vmem>>, %arg5: memref<128x128xf32, #tpu.memory_space<vmem>>, %arg6: memref<4x128xf32, #tpu.memory_space<vmem>>, %arg7: memref<8x128xf32, #tpu.memory_space<vmem>>) attributes {dimension_semantics = [#tpu.dimension_semantics<parallel>], iteration_bounds = array<i64: 1>, scalar_prefetch = 0 : i64, scratch_operands = 0 : i64, tpu.core_type = #tpu.core_type<tc>, window_params = [{transform_indices = @transform_0, window_bounds = array<i64: 8, 32>}, {pipeline_mode = #tpu.pipeline_mode<synchronous>, transform_indices = @transform_1, window_bounds = array<i64: 32, 132>}, {pipeline_mode = #tpu.pipeline_mode<synchronous>, transform_indices = @transform_2, window_bounds = array<i64: 1, 132>}, {pipeline_mode = #tpu.pipeline_mode<synchronous>, transform_indices = @transform_3, window_bounds = array<i64: 4, 128>}, {pipeline_mode = #tpu.pipeline_mode<synchronous>, transform_indices = @transform_4, window_bounds = array<i64: 128, 128>}, {pipeline_mode = #tpu.pipeline_mode<synchronous>, transform_indices = @transform_5, window_bounds = array<i64: 4, 128>}, {transform_indices = @transform_6, window_bounds = array<i64: 8, 128>}]} {
    %c0 = arith.constant 0 : index
    %c0_0 = arith.constant 0 : index
    %0 = vector.load %arg1[%c0, %c0_0] : memref<8x32xf32, #tpu.memory_space<vmem>>, vector<8x32xf32>
    %c0_1 = arith.constant 0 : index
    %c0_2 = arith.constant 0 : index
    %1 = vector.load %arg2[%c0_1, %c0_2] : memref<32x132xf32, #tpu.memory_space<vmem>>, vector<32x132xf32>
    %cst = arith.constant dense<0.000000e+00> : vector<8x132xf32>
    %2 = tpu.matmul %0, %1, %cst {dimension_numbers = #tpu.dot_dimension_numbers<[1], [0], [0], [1], [0, 0, 1, 1], [], []>} : vector<8x32xf32>, vector<32x132xf32>, vector<8x132xf32> -> vector<8x132xf32>
    %c0_3 = arith.constant 0 : index
    %c0_4 = arith.constant 0 : index
    %3 = vector.load %arg3[%c0_3, %c0_4] : memref<1x132xf32, #tpu.memory_space<vmem>>, vector<1x132xf32>
    %4 = vector.broadcast %3 : vector<1x132xf32> to vector<8x132xf32>
    %5 = arith.addf %2, %4 : vector<8x132xf32>
    %6 = vector.extract_strided_slice %5 {offsets = [0, 0], sizes = [8, 128], strides = [1, 1]} : vector<8x132xf32> to vector<8x128xf32>
    %7 = vector.extract_strided_slice %5 {offsets = [0, 128], sizes = [8, 4], strides = [1, 1]} : vector<8x132xf32> to vector<8x4xf32>
    %cst_5 = arith.constant dense<0xFF800000> : vector<8xf32>
    %8 = vector.multi_reduction <maximumf>, %7, %cst_5 [1] : vector<8x4xf32> to vector<8xf32>
    %9 = vector.shape_cast %8 : vector<8xf32> to vector<8x1xf32>
    %10 = vector.broadcast %9 : vector<8x1xf32> to vector<8x4xf32>
    %11 = arith.cmpf oeq, %7, %10 : vector<8x4xf32>
    %cst_6 = arith.constant 0xFF800000 : f32
    %12 = vector.broadcast %cst_6 : f32 to vector<8x4xf32>
    %13 = arith.select %11, %12, %7 : vector<8x4xi1>, vector<8x4xf32>
    %cst_7 = arith.constant dense<0xFF800000> : vector<8xf32>
    %14 = vector.multi_reduction <maximumf>, %13, %cst_7 [1] : vector<8x4xf32> to vector<8xf32>
    %15 = vector.shape_cast %14 : vector<8xf32> to vector<8x1xf32>
    %16 = vector.broadcast %15 : vector<8x1xf32> to vector<8x4xf32>
    %17 = arith.cmpf olt, %7, %16 : vector<8x4xf32>
    %cst_8 = arith.constant dense<0xFF800000> : vector<8xf32>
    %18 = vector.multi_reduction <maximumf>, %7, %cst_8 [1] : vector<8x4xf32> to vector<8xf32>
    %19 = vector.shape_cast %18 : vector<8xf32> to vector<8x1xf32>
    %20 = vector.broadcast %19 : vector<8x1xf32> to vector<8x4xf32>
    %21 = arith.subf %7, %20 : vector<8x4xf32>
    %22 = math.exp %21 : vector<8x4xf32>
    %cst_9 = arith.constant dense<0.000000e+00> : vector<8xf32>
    %23 = vector.multi_reduction <add>, %22, %cst_9 [1] : vector<8x4xf32> to vector<8xf32>
    %24 = vector.shape_cast %23 : vector<8xf32> to vector<8x1xf32>
    %25 = vector.broadcast %24 : vector<8x1xf32> to vector<8x4xf32>
    %26 = arith.divf %22, %25 : vector<8x4xf32>
    %cst_10 = arith.constant 1.000000e+00 : f32
    %27 = vector.broadcast %cst_10 : f32 to vector<8x4xf32>
    %28 = arith.addf %26, %27 : vector<8x4xf32>
    %29 = math.log %28 : vector<8x4xf32>
    %cst_11 = arith.constant 1.000000e+01 : f32
    %30 = vector.broadcast %cst_11 : f32 to vector<8x4xf32>
    %31 = arith.mulf %30, %29 : vector<8x4xf32>
    %32 = math.exp %26 : vector<8x4xf32>
    %cst_12 = arith.constant 1.000000e+00 : f32
    %33 = vector.broadcast %cst_12 : f32 to vector<8x4xf32>
    %34 = arith.subf %32, %33 : vector<8x4xf32>
    %cst_13 = arith.constant 1.000000e+01 : f32
    %35 = vector.broadcast %cst_13 : f32 to vector<8x4xf32>
    %36 = arith.mulf %35, %34 : vector<8x4xf32>
    %37 = arith.select %17, %31, %36 : vector<8x4xi1>, vector<8x4xf32>
    %cst_14 = arith.constant dense<0xFF800000> : vector<8xf32>
    %38 = vector.multi_reduction <maximumf>, %37, %cst_14 [1] : vector<8x4xf32> to vector<8xf32>
    %39 = vector.shape_cast %38 : vector<8xf32> to vector<8x1xf32>
    %40 = vector.broadcast %39 : vector<8x1xf32> to vector<8x4xf32>
    %41 = arith.subf %37, %40 : vector<8x4xf32>
    %42 = math.exp %41 : vector<8x4xf32>
    %cst_15 = arith.constant dense<0.000000e+00> : vector<8xf32>
    %43 = vector.multi_reduction <add>, %42, %cst_15 [1] : vector<8x4xf32> to vector<8xf32>
    %44 = vector.shape_cast %43 : vector<8xf32> to vector<8x1xf32>
    %45 = vector.broadcast %44 : vector<8x1xf32> to vector<8x4xf32>
    %46 = arith.divf %42, %45 : vector<8x4xf32>
    %cst_16 = arith.constant 5.000000e-01 : f32
    %47 = vector.broadcast %cst_16 : f32 to vector<8x128xf32>
    %48 = arith.mulf %47, %6 : vector<8x128xf32>
    %cst_17 = arith.constant 0.707106769 : f32
    %49 = vector.broadcast %cst_17 : f32 to vector<8x128xf32>
    %50 = arith.mulf %6, %49 : vector<8x128xf32>
    %51 = math.erf %50 : vector<8x128xf32>
    %cst_18 = arith.constant 1.000000e+00 : f32
    %52 = vector.broadcast %cst_18 : f32 to vector<8x128xf32>
    %53 = arith.addf %52, %51 : vector<8x128xf32>
    %54 = arith.mulf %48, %53 : vector<8x128xf32>
    %c0_19 = arith.constant 0 : index
    %c0_20 = arith.constant 0 : index
    %55 = vector.load %arg4[%c0_19, %c0_20] : memref<4x128xf32, #tpu.memory_space<vmem>>, vector<4x128xf32>
    %cst_21 = arith.constant dense<0.000000e+00> : vector<8x128xf32>
    %56 = tpu.matmul %46, %55, %cst_21 {dimension_numbers = #tpu.dot_dimension_numbers<[1], [0], [0], [1], [0, 0, 1, 1], [], []>} : vector<8x4xf32>, vector<4x128xf32>, vector<8x128xf32> -> vector<8x128xf32>
    %57 = arith.mulf %54, %56 : vector<8x128xf32>
    %c0_22 = arith.constant 0 : index
    %c0_23 = arith.constant 0 : index
    %58 = vector.load %arg5[%c0_22, %c0_23] : memref<128x128xf32, #tpu.memory_space<vmem>>, vector<128x128xf32>
    %cst_24 = arith.constant dense<0.000000e+00> : vector<8x128xf32>
    %59 = tpu.matmul %57, %58, %cst_24 {dimension_numbers = #tpu.dot_dimension_numbers<[1], [0], [0], [1], [0, 0, 1, 1], [], []>} : vector<8x128xf32>, vector<128x128xf32>, vector<8x128xf32> -> vector<8x128xf32>
    %c0_25 = arith.constant 0 : index
    %c0_26 = arith.constant 0 : index
    %60 = vector.load %arg6[%c0_25, %c0_26] : memref<4x128xf32, #tpu.memory_space<vmem>>, vector<4x128xf32>
    %cst_27 = arith.constant dense<0.000000e+00> : vector<8x128xf32>
    %61 = tpu.matmul %46, %60, %cst_27 {dimension_numbers = #tpu.dot_dimension_numbers<[1], [0], [0], [1], [0, 0, 1, 1], [], []>} : vector<8x4xf32>, vector<4x128xf32>, vector<8x128xf32> -> vector<8x128xf32>
    %62 = arith.addf %59, %61 : vector<8x128xf32>
    %c0_28 = arith.constant 0 : index
    %c0_29 = arith.constant 0 : index
    %63 = vector.load %arg7[%c0_28, %c0_29] : memref<8x128xf32, #tpu.memory_space<vmem>>, vector<8x128xf32>
    tpu.vector_store %arg7[%c0_28, %c0_29], %62 {strides = array<i32>} : memref<8x128xf32, #tpu.memory_space<vmem>>, vector<8x128xf32>,
    return
  }
  func.func @transform_0(%arg0: i32) -> (i32, i32) {
    %c0_i32 = arith.constant 0 : i32
    %c0_i32_0 = arith.constant 0 : i32
    return %arg0, %c0_i32 : i32, i32
  }
  func.func @transform_1(%arg0: i32) -> (i32, i32) {
    %c0_i32 = arith.constant 0 : i32
    %c0_i32_0 = arith.constant 0 : i32
    %c0_i32_1 = arith.constant 0 : i32
    return %c0_i32, %c0_i32_0 : i32, i32
  }
  func.func @transform_2(%arg0: i32) -> (i32, i32) {
    %c0_i32 = arith.constant 0 : i32
    %c0_i32_0 = arith.constant 0 : i32
    %c0_i32_1 = arith.constant 0 : i32
    return %c0_i32, %c0_i32_0 : i32, i32
  }
  func.func @transform_3(%arg0: i32) -> (i32, i32) {
    %c0_i32 = arith.constant 0 : i32
    %c0_i32_0 = arith.constant 0 : i32
    %c0_i32_1 = arith.constant 0 : i32
    return %c0_i32, %c0_i32_0 : i32, i32
  }
  func.func @transform_4(%arg0: i32) -> (i32, i32) {
    %c0_i32 = arith.constant 0 : i32
    %c0_i32_0 = arith.constant 0 : i32
    %c0_i32_1 = arith.constant 0 : i32
    return %c0_i32, %c0_i32_0 : i32, i32
  }
  func.func @transform_5(%arg0: i32) -> (i32, i32) {
    %c0_i32 = arith.constant 0 : i32
    %c0_i32_0 = arith.constant 0 : i32
    %c0_i32_1 = arith.constant 0 : i32
    return %c0_i32, %c0_i32_0 : i32, i32
  }
  func.func @transform_6(%arg0: i32) -> (i32, i32) {
    %c0_i32 = arith.constant 0 : i32
    %c0_i32_0 = arith.constant 0 : i32
    return %arg0, %c0_i32 : i32, i32
  }
}

</mosaic_0001>

<llo_original>
// kernel: tpu_custom_call.1
$region0: #{tpu_custom_call.1}
  #allocation0 [shape = 'u32[]', space=smem, size = 0x4, offset = 0x4, fixed_abs, tag = 'smem constant byte address 0x4 - core index']
  #allocation1 [shape = 'u32[144,128]{1,0:T(1,128)}', space=vmem, size = 0x12000, scoped, tag = 'internal scratch']
  %s0 = inlined_call_operand.hbm [shape: f32[8,32], index: 0, kind: input, shape index: {}]
  %s1 = inlined_call_operand.hbm [shape: f32[32,132], index: 1, kind: input, shape index: {}]
  %s2 = inlined_call_operand.vmem [shape: f32[1,132], index: 2, kind: input, shape index: {}]
  %s3 = inlined_call_operand.vmem [shape: f32[4,128], index: 3, kind: input, shape index: {}]
  %s4 = inlined_call_operand.hbm [shape: f32[128,128], index: 4, kind: input, shape index: {}]
  %s5 = inlined_call_operand.vmem [shape: f32[4,128], index: 5, kind: input, shape index: {}]
  %s6 = inlined_call_operand.hbm [shape: f32[8,128], index: 6, kind: output, shape index: {}]
  %s7 = sld [smem:[#allocation0]]
  $region46: #{tpu_custom_call.1} parent=0
    _
  %s9 = ssub.s32 1, %s7
  %s10 = scalar_select 0, %s9, %s7
  $region1: #{tpu_custom_call.1} parent=0
    #allocation2 [shape = 'u8[4096]{0}', space=vmem, size = 0x1000, scoped, tag = 'input window, operand 0, single buffered']
    #allocation3 [shape = 's32[1]{0}', space=sflag, size = 0x4, scoped, tag = 'scoped memory for tpu_custom_call.1']
    #allocation4 [shape = 's32[1]{0}', space=sflag, size = 0x4, scoped, tag = 'scoped memory for tpu_custom_call.1']
    #allocation5 [shape = 'u8[32768]{0}', space=vmem, size = 0x8000, scoped, tag = 'input window, operand 1, single buffered']
    #allocation6 [shape = 's32[1]{0}', space=sflag, size = 0x4, scoped, tag = 'scoped memory for tpu_custom_call.1']
    #allocation7 [shape = 'u8[65536]{0}', space=vmem, size = 0x10000, scoped, tag = 'input window, operand 4, single buffered']
    #allocation8 [shape = 'u8[4096]{0}', space=vmem, size = 0x1000, scoped, tag = 'output window, operand 0, single buffered']
    %11 = vsyncpa [#allocation3], 0
    %12 = vsyncpa [#allocation6], 0
    %13 = vsyncpa [#allocation4], 0
    // Predicated region
    $region2: #{tpu_custom_call.1} parent=1 // pred_check
      _
    $region3: #{tpu_custom_call.1} parent=1 // pred_check_branch
      %15 = sbr.rel (0) target = $region5
    $region4: #{tpu_custom_call.1} parent=1 // pred_region
      %s17 = ssub.s32 128, 128
      %18 = vsyncadd [#allocation3], %s17
      %s20 = sshll.u32 [#allocation2], 4
      %s21 = int_to_ptr.vmem [resolvable:$true] %s20
      %23 = dma.hbm_to_vmem [thread:$0]  %s0, 128, %s21, [#allocation3]
    $region5: #{tpu_custom_call.1} parent=1 // pred_fallthru
      _
    // Predicated region
    $region6: #{tpu_custom_call.1} parent=1 // pred_check
      _
    $region7: #{tpu_custom_call.1} parent=1 // pred_check_branch
      %25 = sbr.rel (0) target = $region9
    $region8: #{tpu_custom_call.1} parent=1 // pred_region
      %s27 = ssub.s32 1024, 1024
      %28 = vsyncadd [#allocation6], %s27
      %s29 = sshll.u32 [#allocation5], 4
      %s30 = int_to_ptr.vmem [resolvable:$true] %s29
      %35 = dma.hbm_to_vmem [thread:$0]  %s1, 1024, %s30, [#allocation6], 256, 256, 16
    $region9: #{tpu_custom_call.1} parent=1 // pred_fallthru
      _
    // Predicated region
    $region10: #{tpu_custom_call.1} parent=1 // pred_check
      _
    $region11: #{tpu_custom_call.1} parent=1 // pred_check_branch
      %37 = sbr.rel (0) target = $region13
    $region12: #{tpu_custom_call.1} parent=1 // pred_region
      _
    $region13: #{tpu_custom_call.1} parent=1 // pred_fallthru
      _
    // Predicated region
    $region14: #{tpu_custom_call.1} parent=1 // pred_check
      _
    $region15: #{tpu_custom_call.1} parent=1 // pred_check_branch
      %39 = sbr.rel (0) target = $region17
    $region16: #{tpu_custom_call.1} parent=1 // pred_region
      _
    $region17: #{tpu_custom_call.1} parent=1 // pred_fallthru
      _
    // Predicated region
    $region18: #{tpu_custom_call.1} parent=1 // pred_check
      _
    $region19: #{tpu_custom_call.1} parent=1 // pred_check_branch
      %41 = sbr.rel (0) target = $region21
    $region20: #{tpu_custom_call.1} parent=1 // pred_region
      %s43 = ssub.s32 2048, 2048
      %44 = vsyncadd [#allocation6], %s43
      %s45 = sshll.u32 [#allocation7], 4
      %s46 = int_to_ptr.vmem [resolvable:$true] %s45
      %51 = dma.hbm_to_vmem [thread:$0]  %s4, 2048, %s46, [#allocation6], 128, 128, 8
    $region21: #{tpu_custom_call.1} parent=1 // pred_fallthru
      _
    // Predicated region
    $region22: #{tpu_custom_call.1} parent=1 // pred_check
      _
    $region23: #{tpu_custom_call.1} parent=1 // pred_check_branch
      %53 = sbr.rel (0) target = $region25
    $region24: #{tpu_custom_call.1} parent=1 // pred_region
      _
    $region25: #{tpu_custom_call.1} parent=1 // pred_fallthru
      _
    // Predicated region
    $region26: #{tpu_custom_call.1} parent=1 // pred_check
      _
    $region27: #{tpu_custom_call.1} parent=1 // pred_check_branch
      %55 = sbr.rel (0) target = $region29
    $region28: #{tpu_custom_call.1} parent=1 // pred_region
      %56 = dma.done [#allocation3], 128
    $region29: #{tpu_custom_call.1} parent=1 // pred_fallthru
      _
    // Predicated region
    $region30: #{tpu_custom_call.1} parent=1 // pred_check
      _
    $region31: #{tpu_custom_call.1} parent=1 // pred_check_branch
      %58 = sbr.rel (0) target = $region33
    $region32: #{tpu_custom_call.1} parent=1 // pred_region
      %59 = dma.done [#allocation6], 1024
    $region33: #{tpu_custom_call.1} parent=1 // pred_fallthru
      _
    // Predicated region
    $region34: #{tpu_custom_call.1} parent=1 // pred_check
      _
    $region35: #{tpu_custom_call.1} parent=1 // pred_check_branch
      %61 = sbr.rel (0) target = $region37
    $region36: #{tpu_custom_call.1} parent=1 // pred_region
      %62 = dma.done [#allocation6], 2048
    $region37: #{tpu_custom_call.1} parent=1 // pred_fallthru
      _
    %v63 = vld [vmem:[#allocation2] sm:$0xff]
    %v64 = vld [vmem:[#allocation5] sm:$0xff]
    %v65 = vld [vmem:[#allocation5 + $0x8] sm:$0xff]
    %v66 = vld [vmem:[#allocation5 + $0x10] sm:$0xff]
    %v67 = vld [vmem:[#allocation5 + $0x18] sm:$0xff]
    %v68 = vld [vmem:[#allocation5 + $0x20] sm:$0xff]
    %v69 = vld [vmem:[#allocation5 + $0x28] sm:$0xff]
    %v70 = vld [vmem:[#allocation5 + $0x30] sm:$0xff]
    %v71 = vld [vmem:[#allocation5 + $0x38] sm:$0xff]
    %v72 = vld [vmem:[%s2] sm:$0x3]
    %v74 = vlaneseq
    %v75 = vshrl.u32 %v74, 7
    %v76 = vsub.s32 0, %v75
    %v77 = vrot.slane %v72, %v76
    %v78 = vlaneseq
    %v79 = vshrl.u32 %v78, 7
    %v80 = vsub.s32 1, %v79
    %v81 = vrot.slane %v72, %v80
    %vm84 = vcmask 261120
    %v86 = vsel %vm84, %v63, 0
    %88 = vmatprep.subr.mxu0 %v65
    %89 = vmatpush1.msra.mxu0 %v64
    %90 = vmatprep.subr.mxu0 %v67
    %91 = vmatpush1.msra.mxu0 %v66
    %92 = vmatprep.subr.mxu0 %v69
    %93 = vmatpush1.msra.mxu0 %v68
    %94 = vmatprep.subr.mxu0 %v71
    %95 = vmatpush1.msra.mxu0 %v70
    %96 = vmatprep.subr.mxu0 0.0
    %97 = vmatpush1.msra.mxu0 0.0
    %98 = vmatprep.subr.mxu0 0.0
    %99 = vmatpush1.msra.mxu0 0.0
    %100 = vmatprep.subr.mxu0 0.0
    %101 = vmatpush1.msra.mxu0 0.0
    %102 = vmatprep.subr.mxu0 0.0
    %103 = vmatpush1.msra.mxu0 0.0
    %104 = vmatprep.subr.mxu0 0.0
    %105 = vmatpush1.msra.mxu0 0.0
    %106 = vmatprep.subr.mxu0 0.0
    %107 = vmatpush1.msra.mxu0 0.0
    %108 = vmatprep.subr.mxu0 0.0
    %109 = vmatpush1.msra.mxu0 0.0
    %110 = vmatprep.subr.mxu0 0.0
    %111 = vmatpush1.msra.mxu0 0.0
    %112 = vmatprep.subr.mxu0 0.0
    %113 = vmatpush1.msra.mxu0 0.0
    %114 = vmatprep.subr.mxu0 0.0
    %115 = vmatpush1.msra.mxu0 0.0
    %116 = vmatprep.subr.mxu0 0.0
    %117 = vmatpush1.msra.mxu0 0.0
    %118 = vmatprep.subr.mxu0 0.0
    %119 = vmatpush1.msra.mxu0 0.0
    %120 = vmatprep.subr.mxu0 0.0
    %121 = vmatpush1.msra.mxu0 0.0
    %122 = vmatprep.subr.mxu0 0.0
    %123 = vmatpush1.msra.mxu0 0.0
    %124 = vmatprep.subr.mxu0 0.0
    %125 = vmatpush1.msra.mxu0 0.0
    %126 = vmatprep.subr.mxu0 0.0
    %127 = vmatpush1.msra.mxu0 0.0
    %128 = vmatprep.subr.mxu0 0.0
    %129 = vmatpush1.msra.mxu0 0.0
    %130 = vmatprep.subr.mxu0 0.0
    %131 = vmatpush1.msra.mxu0 0.0
    %132 = vmatprep.subr.mxu0 0.0
    %133 = vmatpush1.msra.mxu0 0.0
    %134 = vmatprep.subr.mxu0 0.0
    %135 = vmatpush1.msra.mxu0 0.0
    %136 = vmatprep.subr.mxu0 0.0
    %137 = vmatpush1.msra.mxu0 0.0
    %138 = vmatprep.subr.mxu0 0.0
    %139 = vmatpush1.msra.mxu0 0.0
    %140 = vmatprep.subr.mxu0 0.0
    %141 = vmatpush1.msra.mxu0 0.0
    %142 = vmatprep.subr.mxu0 0.0
    %143 = vmatpush1.msra.mxu0 0.0
    %144 = vmatprep.subr.mxu0 0.0
    %145 = vmatpush1.msra.mxu0 0.0
    %146 = vmatprep.subr.mxu0 0.0
    %147 = vmatpush1.msra.mxu0 0.0
    %148 = vmatprep.subr.mxu0 0.0
    %149 = vmatpush1.msra.mxu0 0.0
    %150 = vmatprep.subr.mxu0 0.0
    %151 = vmatpush1.msra.mxu0 0.0
    %152 = vmatprep.mubr.f32.mxu0 0.0
    %153 = vmatmul.mubr.f32.gmra.mrb[0].mxu0 %v86
    %v154 = vpop.f32.mrb[0].mxu0
    %v155 = vadd.f32 %v77, %v154
    %v156 = vpop.f32.mrb[0].mxu0
    %v157 = vadd.f32 %v81, %v156
    %158 = vdwg.mxu0
    %vm159 = vcmask 31744
    %v160 = vsel %vm159, %v157, -inf
    %161 = vmax.xlane.f32.xlu0 %v160
    %v162 = vpop.xlane.xlu0 %161
    %vm163 = vcmp.eq.f32.partialorder %v157, %v162
    %v164 = vsel %vm163, -inf, %v157
    %v165 = vsel %vm159, %v164, -inf
    %166 = vmax.xlane.f32.xlu0 %v165
    %v167 = vpop.xlane.xlu0 %166
    %vm168 = vcmp.lt.f32.partialorder %v157, %v167
    %v169 = vsub.f32 %v157, %v162
    %v170 = vmul.f32 %v169, 1.442695
    %v171 = vpow.pop %v170
    %v172 = vsel %vm159, %v171, 0.0
    %173 = vadd.xlane.f32.xlu0 %v172
    %v174 = vpop.xlane.xlu0 %173
    %v175 = vrcp.pop %v174
    %v176 = vmul.f32 %v171, %v175
    %v177 = vadd.f32 %v176, 1.0
    %v178 = vlog2.pop %v177
    %v179 = vmul.f32 %v178, 0.6931472
    %v180 = vmul.f32 %v179, 10.0
    %v181 = vmul.f32 %v176, 1.442695
    %v182 = vpow.pop %v181
    %v183 = vsub.f32 %v182, 1.0
    %v184 = vmul.f32 %v183, 10.0
    %v185 = vsel %vm168, %v180, %v184
    %v186 = vsel %vm159, %v185, -inf
    %187 = vmax.xlane.f32.xlu0 %v186
    %v188 = vpop.xlane.xlu0 %187
    %v189 = vsub.f32 %v185, %v188
    %v190 = vmul.f32 %v189, 1.442695
    %v191 = vpow.pop %v190
    %v192 = vsel %vm159, %v191, 0.0
    %193 = vadd.xlane.f32.xlu0 %v192
    %v194 = vpop.xlane.xlu0 %193
    %v195 = vrcp.pop %v194
    %v196 = vmul.f32 %v191, %v195
    %v197 = vmul.f32 %v155, 0.5
    %v198 = vmul.f32 %v155, 0.70710677
    %v199 = verf.f32.pop %v198
    %v200 = vadd.f32 %v199, 1.0
    %v201 = vmul.f32 %v197, %v200
    %v202 = vld [vmem:[%s3] sm:$0xf]
    %v204 = vsel %vm159, %v196, 0
    %vm206 = vcmask 1043456
    %v208 = vsel %vm206, %v202, 0
    %210 = vmatprep.subr.mxu0 0.0
    %211 = vmatpush1.msra.mxu0 %v208
    %212 = vmatprep.subr.mxu0 0.0
    %213 = vmatpush1.msra.mxu0 0.0
    %214 = vmatprep.subr.mxu0 0.0
    %215 = vmatpush1.msra.mxu0 0.0
    %216 = vmatprep.subr.mxu0 0.0
    %217 = vmatpush1.msra.mxu0 0.0
    %218 = vmatprep.subr.mxu0 0.0
    %219 = vmatpush1.msra.mxu0 0.0
    %220 = vmatprep.subr.mxu0 0.0
    %221 = vmatpush1.msra.mxu0 0.0
    %222 = vmatprep.subr.mxu0 0.0
    %223 = vmatpush1.msra.mxu0 0.0
    %224 = vmatprep.subr.mxu0 0.0
    %225 = vmatpush1.msra.mxu0 0.0
    %226 = vmatprep.subr.mxu0 0.0
    %227 = vmatpush1.msra.mxu0 0.0
    %228 = vmatprep.subr.mxu0 0.0
    %229 = vmatpush1.msra.mxu0 0.0
    %230 = vmatprep.subr.mxu0 0.0
    %231 = vmatpush1.msra.mxu0 0.0
    %232 = vmatprep.subr.mxu0 0.0
    %233 = vmatpush1.msra.mxu0 0.0
    %234 = vmatprep.subr.mxu0 0.0
    %235 = vmatpush1.msra.mxu0 0.0
    %236 = vmatprep.subr.mxu0 0.0
    %237 = vmatpush1.msra.mxu0 0.0
    %238 = vmatprep.subr.mxu0 0.0
    %239 = vmatpush1.msra.mxu0 0.0
    %240 = vmatprep.subr.mxu0 0.0
    %241 = vmatpush1.msra.mxu0 0.0
    %242 = vmatprep.subr.mxu0 0.0
    %243 = vmatpush1.msra.mxu0 0.0
    %244 = vmatprep.subr.mxu0 0.0
    %245 = vmatpush1.msra.mxu0 0.0
    %246 = vmatprep.subr.mxu0 0.0
    %247 = vmatpush1.msra.mxu0 0.0
    %248 = vmatprep.subr.mxu0 0.0
    %249 = vmatpush1.msra.mxu0 0.0
    %250 = vmatprep.subr.mxu0 0.0
    %251 = vmatpush1.msra.mxu0 0.0
    %252 = vmatprep.subr.mxu0 0.0
    %253 = vmatpush1.msra.mxu0 0.0
    %254 = vmatprep.subr.mxu0 0.0
    %255 = vmatpush1.msra.mxu0 0.0
    %256 = vmatprep.subr.mxu0 0.0
    %257 = vmatpush1.msra.mxu0 0.0
    %258 = vmatprep.subr.mxu0 0.0
    %259 = vmatpush1.msra.mxu0 0.0
    %260 = vmatprep.subr.mxu0 0.0
    %261 = vmatpush1.msra.mxu0 0.0
    %262 = vmatprep.subr.mxu0 0.0
    %263 = vmatpush1.msra.mxu0 0.0
    %264 = vmatprep.subr.mxu0 0.0
    %265 = vmatpush1.msra.mxu0 0.0
    %266 = vmatprep.subr.mxu0 0.0
    %267 = vmatpush1.msra.mxu0 0.0
    %268 = vmatprep.subr.mxu0 0.0
    %269 = vmatpush1.msra.mxu0 0.0
    %270 = vmatprep.subr.mxu0 0.0
    %271 = vmatpush1.msra.mxu0 0.0
    %272 = vmatprep.subr.mxu0 0.0
    %273 = vmatpush1.msra.mxu0 0.0
    %274 = vmatprep.mubr.f32.mxu0 0.0
    %275 = vmatmul.mubr.f32.gmra.mrb[0].mxu0 %v204
    %v276 = vpop.f32.mrb[0].mxu0
    %v277 = vadd.f32 0.0, %v276
    %v278 = vpop.f32.mrb[0].mxu0
    %279 = vdwg.mxu0
    %v280 = vmul.f32 %v201, %v277
    %v281 = vld [vmem:[#allocation7] sm:$0xff]
    %v282 = vld [vmem:[#allocation7 + $0x8] sm:$0xff]
    %v283 = vld [vmem:[#allocation7 + $0x10] sm:$0xff]
    %v284 = vld [vmem:[#allocation7 + $0x18] sm:$0xff]
    %v285 = vld [vmem:[#allocation7 + $0x20] sm:$0xff]
    %v286 = vld [vmem:[#allocation7 + $0x28] sm:$0xff]
    %v287 = vld [vmem:[#allocation7 + $0x30] sm:$0xff]
    %v288 = vld [vmem:[#allocation7 + $0x38] sm:$0xff]
    %v289 = vld [vmem:[#allocation7 + $0x40] sm:$0xff]
    %v290 = vld [vmem:[#allocation7 + $0x48] sm:$0xff]
    %v291 = vld [vmem:[#allocation7 + $0x50] sm:$0xff]
    %v292 = vld [vmem:[#allocation7 + $0x58] sm:$0xff]
    %v293 = vld [vmem:[#allocation7 + $0x60] sm:$0xff]
    %v294 = vld [vmem:[#allocation7 + $0x68] sm:$0xff]
    %v295 = vld [vmem:[#allocation7 + $0x70] sm:$0xff]
    %v296 = vld [vmem:[#allocation7 + $0x78] sm:$0xff]
    %v297 = vld [vmem:[%s5] sm:$0xf]
    %v299 = vsel %vm206, %v297, 0
    %301 = vmatprep.subr.mxu0 0.0
    %302 = vmatpush1.msra.mxu0 %v299
    %303 = vmatprep.subr.mxu0 0.0
    %304 = vmatpush1.msra.mxu0 0.0
    %305 = vmatprep.subr.mxu0 0.0
    %306 = vmatpush1.msra.mxu0 0.0
    %307 = vmatprep.subr.mxu0 0.0
    %308 = vmatpush1.msra.mxu0 0.0
    %309 = vmatprep.subr.mxu0 0.0
    %310 = vmatpush1.msra.mxu0 0.0
    %311 = vmatprep.subr.mxu0 0.0
    %312 = vmatpush1.msra.mxu0 0.0
    %313 = vmatprep.subr.mxu0 0.0
    %314 = vmatpush1.msra.mxu0 0.0
    %315 = vmatprep.subr.mxu0 0.0
    %316 = vmatpush1.msra.mxu0 0.0
    %317 = vmatprep.subr.mxu0 0.0
    %318 = vmatpush1.msra.mxu0 0.0
    %319 = vmatprep.subr.mxu0 0.0
    %320 = vmatpush1.msra.mxu0 0.0
    %321 = vmatprep.subr.mxu0 0.0
    %322 = vmatpush1.msra.mxu0 0.0
    %323 = vmatprep.subr.mxu0 0.0
    %324 = vmatpush1.msra.mxu0 0.0
    %325 = vmatprep.subr.mxu0 0.0
    %326 = vmatpush1.msra.mxu0 0.0
    %327 = vmatprep.subr.mxu0 0.0
    %328 = vmatpush1.msra.mxu0 0.0
    %329 = vmatprep.subr.mxu0 0.0
    %330 = vmatpush1.msra.mxu0 0.0
    %331 = vmatprep.subr.mxu0 0.0
    %332 = vmatpush1.msra.mxu0 0.0
    %333 = vmatprep.subr.mxu0 0.0
    %334 = vmatpush1.msra.mxu0 0.0
    %335 = vmatprep.subr.mxu0 0.0
    %336 = vmatpush1.msra.mxu0 0.0
    %337 = vmatprep.subr.mxu0 0.0
    %338 = vmatpush1.msra.mxu0 0.0
    %339 = vmatprep.subr.mxu0 0.0
    %340 = vmatpush1.msra.mxu0 0.0
    %341 = vmatprep.subr.mxu0 0.0
    %342 = vmatpush1.msra.mxu0 0.0
    %343 = vmatprep.subr.mxu0 0.0
    %344 = vmatpush1.msra.mxu0 0.0
    %345 = vmatprep.subr.mxu0 0.0
    %346 = vmatpush1.msra.mxu0 0.0
    %347 = vmatprep.subr.mxu0 0.0
    %348 = vmatpush1.msra.mxu0 0.0
    %349 = vmatprep.subr.mxu0 0.0
    %350 = vmatpush1.msra.mxu0 0.0
    %351 = vmatprep.subr.mxu0 0.0
    %352 = vmatpush1.msra.mxu0 0.0
    %353 = vmatprep.subr.mxu0 0.0
    %354 = vmatpush1.msra.mxu0 0.0
    %355 = vmatprep.subr.mxu0 0.0
    %356 = vmatpush1.msra.mxu0 0.0
    %357 = vmatprep.subr.mxu0 0.0
    %358 = vmatpush1.msra.mxu0 0.0
    %359 = vmatprep.subr.mxu0 0.0
    %360 = vmatpush1.msra.mxu0 0.0
    %361 = vmatprep.subr.mxu0 0.0
    %362 = vmatpush1.msra.mxu0 0.0
    %363 = vmatprep.subr.mxu0 0.0
    %364 = vmatpush1.msra.mxu0 0.0
    %365 = vmatprep.mubr.f32.mxu0 0.0
    %366 = vmatmul.mubr.f32.gmra.mrb[0].mxu0 %v204
    %v367 = vpop.f32.mrb[0].mxu0
    %v368 = vadd.f32 0.0, %v367
    %v369 = vpop.f32.mrb[0].mxu0
    %370 = vdwg.mxu0
    %371 = vmatprep.subr.mxu0 0.0
    %372 = vmatpush1.msra.mxu0 %v281
    %373 = vmatprep.subr.mxu0 0.0
    %374 = vmatpush1.msra.mxu0 %v282
    %375 = vmatprep.subr.mxu0 0.0
    %376 = vmatpush1.msra.mxu0 %v283
    %377 = vmatprep.subr.mxu0 0.0
    %378 = vmatpush1.msra.mxu0 %v284
    %379 = vmatprep.subr.mxu0 0.0
    %380 = vmatpush1.msra.mxu0 %v285
    %381 = vmatprep.subr.mxu0 0.0
    %382 = vmatpush1.msra.mxu0 %v286
    %383 = vmatprep.subr.mxu0 0.0
    %384 = vmatpush1.msra.mxu0 %v287
    %385 = vmatprep.subr.mxu0 0.0
    %386 = vmatpush1.msra.mxu0 %v288
    %387 = vmatprep.subr.mxu0 0.0
    %388 = vmatpush1.msra.mxu0 %v289
    %389 = vmatprep.subr.mxu0 0.0
    %390 = vmatpush1.msra.mxu0 %v290
    %391 = vmatprep.subr.mxu0 0.0
    %392 = vmatpush1.msra.mxu0 %v291
    %393 = vmatprep.subr.mxu0 0.0
    %394 = vmatpush1.msra.mxu0 %v292
    %395 = vmatprep.subr.mxu0 0.0
    %396 = vmatpush1.msra.mxu0 %v293
    %397 = vmatprep.subr.mxu0 0.0
    %398 = vmatpush1.msra.mxu0 %v294
    %399 = vmatprep.subr.mxu0 0.0
    %400 = vmatpush1.msra.mxu0 %v295
    %401 = vmatprep.subr.mxu0 0.0
    %402 = vmatpush1.msra.mxu0 %v296
    %403 = vmatprep.subr.mxu0 0.0
    %404 = vmatpush1.msra.mxu0 0.0
    %405 = vmatprep.subr.mxu0 0.0
    %406 = vmatpush1.msra.mxu0 0.0
    %407 = vmatprep.subr.mxu0 0.0
    %408 = vmatpush1.msra.mxu0 0.0
    %409 = vmatprep.subr.mxu0 0.0
    %410 = vmatpush1.msra.mxu0 0.0
    %411 = vmatprep.subr.mxu0 0.0
    %412 = vmatpush1.msra.mxu0 0.0
    %413 = vmatprep.subr.mxu0 0.0
    %414 = vmatpush1.msra.mxu0 0.0
    %415 = vmatprep.subr.mxu0 0.0
    %416 = vmatpush1.msra.mxu0 0.0
    %417 = vmatprep.subr.mxu0 0.0
    %418 = vmatpush1.msra.mxu0 0.0
    %419 = vmatprep.subr.mxu0 0.0
    %420 = vmatpush1.msra.mxu0 0.0
    %421 = vmatprep.subr.mxu0 0.0
    %422 = vmatpush1.msra.mxu0 0.0
    %423 = vmatprep.subr.mxu0 0.0
    %424 = vmatpush1.msra.mxu0 0.0
    %425 = vmatprep.subr.mxu0 0.0
    %426 = vmatpush1.msra.mxu0 0.0
    %427 = vmatprep.subr.mxu0 0.0
    %428 = vmatpush1.msra.mxu0 0.0
    %429 = vmatprep.subr.mxu0 0.0
    %430 = vmatpush1.msra.mxu0 0.0
    %431 = vmatprep.subr.mxu0 0.0
    %432 = vmatpush1.msra.mxu0 0.0
    %433 = vmatprep.subr.mxu0 0.0
    %434 = vmatpush1.msra.mxu0 0.0
    %435 = vmatprep.mubr.f32.mxu0 0.0
    %436 = vmatmul.mubr.f32.gmra.mrb[0].mxu0 %v280
    %v437 = vpop.f32.mrb[0].mxu0
    %v438 = vadd.f32 %v368, %v437
    %v439 = vpop.f32.mrb[0].mxu0
    %440 = vdwg.mxu0
    %441 = vst [vmem:[#allocation8] sm:$0xff] %v438
    // Predicated region
    $region38: #{tpu_custom_call.1} parent=1 // pred_check
      _
    $region39: #{tpu_custom_call.1} parent=1 // pred_check_branch
      %443 = sbr.rel (0) target = $region41
    $region40: #{tpu_custom_call.1} parent=1 // pred_region
      %s445 = ssub.s32 128, 128
      %446 = vsyncadd [#allocation4], %s445
      %s448 = sshll.u32 [#allocation8], 4
      %s449 = int_to_ptr.vmem [resolvable:$true] %s448
      %451 = dma.vmem_to_hbm [thread:$0]  %s449, 128, %s6, [#allocation4]
    $region41: #{tpu_custom_call.1} parent=1 // pred_fallthru
      _
    // Predicated region
    $region42: #{tpu_custom_call.1} parent=1 // pred_check
      _
    $region43: #{tpu_custom_call.1} parent=1 // pred_check_branch
      %453 = sbr.rel (0) target = $region45
    $region44: #{tpu_custom_call.1} parent=1 // pred_region
      %454 = dma.done [#allocation4], 128
    $region45: #{tpu_custom_call.1} parent=1 // pred_fallthru
      _
    %455 = vsyncpa [#allocation3], 1
    %456 = vsyncpa [#allocation6], 1
    %457 = vsyncpa [#allocation4], 1

</llo_original>
